<compile_context>
chip_gen: v5e
topology: v5e:2x2
jax: 0.10.0
libtpu: 0.0.40
codegen_flags: <defaults>
</compile_context>

<pallas_src>
import functools

import numpy as np

import jax
import jax.numpy as jnp
from jax.experimental import pallas as pl
from jax.experimental.pallas import tpu as pltpu


# ---------------------------------------------------------------------------
# Pallas kernels
# ---------------------------------------------------------------------------

def _blur_sep_kernel(x_ref, o_ref, pad_ref, tmp_ref, *, py0, px0, taps_v, taps_h):
    """Separable FIR (horizontal then vertical pass), channels on lanes.

    x_ref:   (hc, wc, tc)  input block (possibly cropped by negative pads)
    o_ref:   (ho, wo, tc)  output block
    pad_ref: (hp, wp, tc)  f32 scratch holding the zero-padded tile
    tmp_ref: (hp, wo, tc)  f32 scratch holding the horizontal-pass result
    """
    hc, wc = x_ref.shape[0], x_ref.shape[1]
    hp, wp = pad_ref.shape[0], pad_ref.shape[1]
    ho, wo = o_ref.shape[0], o_ref.shape[1]

    # Fused zero-pad: single upcast of the tile into an f32 VMEM scratch.
    if py0 == 0 and px0 == 0 and hp == hc and wp == wc:
        pad_ref[...] = x_ref[...].astype(jnp.float32)
    else:
        pad_ref[...] = jnp.zeros_like(pad_ref)
        pad_ref[py0:py0 + hc, px0:px0 + wc, :] = x_ref[...].astype(jnp.float32)

    # Horizontal pass: (hp, wp, tc) -> (hp, wo, tc). kx shifts are on the
    # sublane axis (W); channels stay lane-dense.
    acc = pad_ref[:, 0:wo, :] * taps_h[0]
    for kx in range(1, len(taps_h)):
        acc = acc + pad_ref[:, kx:kx + wo, :] * taps_h[kx]
    tmp_ref[...] = acc

    # Vertical pass: (hp, wo, tc) -> (ho, wo, tc). ky shifts are on the leading
    # (non-lane, non-sublane) axis.
    acc = tmp_ref[0:ho, :, :] * taps_v[0]
    for ky in range(1, len(taps_v)):
        acc = acc + tmp_ref[ky:ky + ho, :, :] * taps_v[ky]
    o_ref[...] = acc.astype(o_ref.dtype)


def _blur_2d_kernel(x_ref, o_ref, pad_ref, *, py0, px0, taps_2d):
    """General (non-separable) 2-D FIR fallback, channels on lanes."""
    hc, wc = x_ref.shape[0], x_ref.shape[1]
    hp, wp = pad_ref.shape[0], pad_ref.shape[1]
    ho, wo = o_ref.shape[0], o_ref.shape[1]

    if py0 == 0 and px0 == 0 and hp == hc and wp == wc:
        pad_ref[...] = x_ref[...].astype(jnp.float32)
    else:
        pad_ref[...] = jnp.zeros_like(pad_ref)
        pad_ref[py0:py0 + hc, px0:px0 + wc, :] = x_ref[...].astype(jnp.float32)

    acc = None
    for ky in range(len(taps_2d)):
        for kx in range(len(taps_2d[0])):
            contrib = pad_ref[ky:ky + ho, kx:kx + wo, :] * taps_2d[ky][kx]
            acc = contrib if acc is None else acc + contrib
    o_ref[...] = acc.astype(o_ref.dtype)


# ---------------------------------------------------------------------------
# Wrapper
# ---------------------------------------------------------------------------

def blur_forward(x, pad, kshape, *, taps_v=None, taps_h=None, taps_2d=None,
                 channel_tile_budget_bytes=4 * 1024 * 1024):
    """upfirdn2d(x, kernel, up=1, down=1, pad=pad) with the FIR in Pallas."""
    N, C, H, W = x.shape
    kh, kw = kshape
    p0, p1 = pad

    ho = H + p0 + p1 - kh + 1
    wo = W + p0 + p1 - kw + 1
    assert ho > 0 and wo > 0, "invalid pad/kernel config"

    nc = N * C
    # Channels-last: (H, W, N*C) so N*C rides the 128-lane axis.
    xc = jnp.transpose(x.reshape(nc, H, W), (1, 2, 0))

    # Negative pads are crops (rare); keep them in JAX (fuses with the transpose).
    cy0 = cx0 = max(-p0, 0)
    cy1 = cx1 = max(-p1, 0)
    if cy0 or cy1 or cx0 or cx1:
        xc = xc[cy0:H - cy1, cx0:W - cx1, :]
    hc, wc = H - cy0 - cy1, W - cx0 - cx1

    # Positive pads are fused into the kernel (zero-initialized VMEM scratch).
    py0 = px0 = max(p0, 0)
    py1 = px1 = max(p1, 0)
    hp, wp = hc + py0 + py1, wc + px0 + px1

    # Channel-group tiling: keep per-block VMEM footprint small enough for
    # v7x (64 MiB VMEM, 32 MiB default scoped limit) while staying lane-dense.
    bytes_per_chan = 4 * (2 * hc * wc      # input block, double-buffered
                          + hp * wp        # padded f32 scratch
                          + hp * wo        # horizontal-pass scratch
                          + 2 * ho * wo)   # output block, double-buffered
    tc_cap = max(1, channel_tile_budget_bytes // bytes_per_chan)
    if nc <= tc_cap or nc <= 128:
        tc = nc
    else:
        tc = max(128, (tc_cap // 128) * 128)   # lane-dense tile
    # TODO(synk): add row tiling for very large spatial extents with few channels.
    ncp = -(-nc // tc) * tc
    if ncp != nc:
        xc = jnp.pad(xc, ((0, 0), (0, 0), (0, ncp - nc)))
    groups = ncp // tc

    if taps_2d is None:
        kern = functools.partial(_blur_sep_kernel, py0=py0, px0=px0,
                                 taps_v=taps_v, taps_h=taps_h)
        scratch = [pltpu.VMEM((hp, wp, tc), jnp.float32),
                   pltpu.VMEM((hp, wo, tc), jnp.float32)]
    else:
        kern = functools.partial(_blur_2d_kernel, py0=py0, px0=px0,
                                 taps_2d=taps_2d)
        scratch = [pltpu.VMEM((hp, wp, tc), jnp.float32)]

    out = pl.pallas_call(
        kern,
        out_shape=jax.ShapeDtypeStruct((ho, wo, ncp), x.dtype),
        grid_spec=pltpu.PrefetchScalarGridSpec(
            num_scalar_prefetch=0,
            grid=(groups,),
            in_specs=[pl.BlockSpec((hc, wc, tc), lambda g: (0, 0, g))],
            out_specs=pl.BlockSpec((ho, wo, tc), lambda g: (0, 0, g)),
            scratch_shapes=scratch),
        compiler_params=pltpu.CompilerParams(
            dimension_semantics=("parallel",)),
    )(xc)

    out = out[:, :, :nc]
    return jnp.transpose(out, (2, 0, 1)).reshape(N, C, ho, wo)


# ---------------------------------------------------------------------------
# Module
# ---------------------------------------------------------------------------

class Blur:
    """JAX/Pallas equivalent of the PyTorch Blur module (upfirdn2d, up=down=1)."""

    def __init__(self, kernel, pad, upsample_factor=1):
        k = np.asarray(kernel, dtype=np.float64)
        if k.ndim == 1:
            kn = k / k.sum()                 # normalized 1-D factor
            k2 = np.outer(kn, kn)            # == make_kernel(kernel)
            sep_v, sep_h = kn.copy(), kn.copy()
        else:
            k2 = k / k.sum()
            sep_v = sep_h = None
        if upsample_factor > 1:
            scale = float(upsample_factor) ** 2
            k2 = k2 * scale
            if sep_v is not None:
                sep_v = sep_v * scale
        self.kernel = jnp.asarray(k2, dtype=jnp.float32)   # buffer equivalent
        self.pad = tuple(pad)
        self._kshape = tuple(k2.shape)

        # F.conv2d(padded, flip(kernel)) == cross-correlation with the flipped
        # kernel; pre-flip the taps here and do a straight cross-correlation
        # in-kernel. flip(outer(a, a)) == outer(flip(a), flip(a)).
        if sep_v is not None:
            self._taps_v = tuple(float(t) for t in sep_v[::-1])
            self._taps_h = tuple(float(t) for t in sep_h[::-1])
            self._taps_2d = None
        else:
            kf = k2[::-1, ::-1]
            self._taps_2d = tuple(tuple(float(t) for t in row) for row in kf)
            self._taps_v = self._taps_h = None

    def __call__(self, x):
        return blur_forward(x, self.pad, self._kshape,
                            taps_v=self._taps_v, taps_h=self._taps_h,
                            taps_2d=self._taps_2d)


# ---------------------------------------------------------------------------
# Pure-JAX reference (lax depthwise conv) for correctness checks
# ---------------------------------------------------------------------------

def _reference_blur(x, kernel, pad):
    N, C, H, W = x.shape
    kh, kw = kernel.shape
    p0, p1 = pad
    xp = x.reshape(N * C, 1, H, W)
    xp = jnp.pad(xp, ((0, 0), (0, 0),
                      (max(p0, 0), max(p1, 0)),
                      (max(p0, 0), max(p1, 0))))
    xp = xp[:, :,
            max(-p0, 0): xp.shape[2] - max(-p1, 0),
            max(-p0, 0): xp.shape[3] - max(-p1, 0)]
    w = kernel[::-1, ::-1][None, None, :, :]
    out = jax.lax.conv_general_dilated(
        xp, w, window_strides=(1, 1), padding="VALID",
        dimension_numbers=("NCHW", "OIHW", "NCHW"))
    ho = H + p0 + p1 - kh + 1
    wo = W + p0 + p1 - kw + 1
    return out.reshape(N, C, ho, wo)


if __name__ == "__main__":
    key = jax.random.PRNGKey(0)

    # Primary config: StyleGAN2 blur kernel [1,3,3,1], pad=(2,1) -> separable path.
    N, C, H, W = 2, 4, 16, 16
    x = jax.random.normal(key, (N, C, H, W), dtype=jnp.float32)
    blur = Blur([1, 3, 3, 1], pad=(2, 1), upsample_factor=1)
    y = jax.block_until_ready(blur(x))
    y_ref = _reference_blur(x, blur.kernel, blur.pad)
    assert y.shape == y_ref.shape, (y.shape, y_ref.shape)
    assert jnp.allclose(y, y_ref, atol=1e-5, rtol=1e-5), "separable path mismatch"

    # Secondary config: explicit 2-D kernel -> non-separable fallback path.
    x2 = jax.random.normal(jax.random.PRNGKey(1), (1, 3, 8, 8), dtype=jnp.float32)
    blur2 = Blur(np.array([[1., 2., 1.], [2., 4., 2.], [1., 2., 1.]]), pad=(1, 1))
    y2 = jax.block_until_ready(blur2(x2))
    y2_ref = _reference_blur(x2, blur2.kernel, blur2.pad)
    assert y2.shape == y2_ref.shape, (y2.shape, y2_ref.shape)
    assert jnp.allclose(y2, y2_ref, atol=1e-5, rtol=1e-5), "2-D path mismatch"

    print("KERNEL_OK")
</pallas_src>

<mosaic_0001>
module attributes {stable_mosaic.version = 11 : i64} {
  func.func @_blur_sep_kernel(%arg0: i32, %arg1: memref<16x16x8xf32, #tpu.memory_space<vmem>>, %arg2: memref<16x16x8xf32, #tpu.memory_space<vmem>>, %arg3: memref<19x19x8xf32, #tpu.memory_space<vmem>>, %arg4: memref<19x16x8xf32, #tpu.memory_space<vmem>>) attributes {dimension_semantics = [#tpu.dimension_semantics<parallel>], iteration_bounds = array<i64: 1>, scalar_prefetch = 0 : i64, scratch_operands = 2 : i64, tpu.core_type = #tpu.core_type<tc>, window_params = [{transform_indices = @transform_0, window_bounds = array<i64: 16, 16, 8>}, {transform_indices = @transform_1, window_bounds = array<i64: 16, 16, 8>}]} {
    %cst = arith.constant 0.000000e+00 : f32
    %0 = vector.broadcast %cst : f32 to vector<19x19x8xf32>
    %c0 = arith.constant 0 : index
    %c0_0 = arith.constant 0 : index
    %c0_1 = arith.constant 0 : index
    %1 = vector.load %arg3[%c0, %c0_0, %c0_1] : memref<19x19x8xf32, #tpu.memory_space<vmem>>, vector<19x19x8xf32>
    tpu.vector_store %arg3[%c0, %c0_0, %c0_1], %0 {strides = array<i32>} : memref<19x19x8xf32, #tpu.memory_space<vmem>>, vector<19x19x8xf32>,
    %c0_2 = arith.constant 0 : index
    %c0_3 = arith.constant 0 : index
    %c0_4 = arith.constant 0 : index
    %2 = vector.load %arg1[%c0_2, %c0_3, %c0_4] : memref<16x16x8xf32, #tpu.memory_space<vmem>>, vector<16x16x8xf32>
    %c2 = arith.constant 2 : index
    %c2_5 = arith.constant 2 : index
    %c0_6 = arith.constant 0 : index
    %3 = vector.load %arg3[%c2, %c2_5, %c0_6] : memref<19x19x8xf32, #tpu.memory_space<vmem>>, vector<16x16x8xf32>
    tpu.vector_store %arg3[%c2, %c2_5, %c0_6], %2 {strides = array<i32>} : memref<19x19x8xf32, #tpu.memory_space<vmem>>, vector<16x16x8xf32>,
    %c0_7 = arith.constant 0 : index
    %c0_8 = arith.constant 0 : index
    %c0_9 = arith.constant 0 : index
    %4 = vector.load %arg3[%c0_7, %c0_8, %c0_9] : memref<19x19x8xf32, #tpu.memory_space<vmem>>, vector<19x16x8xf32>
    %cst_10 = arith.constant 1.250000e-01 : f32
    %5 = vector.broadcast %cst_10 : f32 to vector<19x16x8xf32>
    %6 = arith.mulf %4, %5 : vector<19x16x8xf32>
    %c0_11 = arith.constant 0 : index
    %c1 = arith.constant 1 : index
    %c0_12 = arith.constant 0 : index
    %7 = vector.load %arg3[%c0_11, %c1, %c0_12] : memref<19x19x8xf32, #tpu.memory_space<vmem>>, vector<19x16x8xf32>
    %cst_13 = arith.constant 3.750000e-01 : f32
    %8 = vector.broadcast %cst_13 : f32 to vector<19x16x8xf32>
    %9 = arith.mulf %7, %8 : vector<19x16x8xf32>
    %10 = arith.addf %6, %9 : vector<19x16x8xf32>
    %c0_14 = arith.constant 0 : index
    %c2_15 = arith.constant 2 : index
    %c0_16 = arith.constant 0 : index
    %11 = vector.load %arg3[%c0_14, %c2_15, %c0_16] : memref<19x19x8xf32, #tpu.memory_space<vmem>>, vector<19x16x8xf32>
    %cst_17 = arith.constant 3.750000e-01 : f32
    %12 = vector.broadcast %cst_17 : f32 to vector<19x16x8xf32>
    %13 = arith.mulf %11, %12 : vector<19x16x8xf32>
    %14 = arith.addf %10, %13 : vector<19x16x8xf32>
    %c0_18 = arith.constant 0 : index
    %c3 = arith.constant 3 : index
    %c0_19 = arith.constant 0 : index
    %15 = vector.load %arg3[%c0_18, %c3, %c0_19] : memref<19x19x8xf32, #tpu.memory_space<vmem>>, vector<19x16x8xf32>
    %cst_20 = arith.constant 1.250000e-01 : f32
    %16 = vector.broadcast %cst_20 : f32 to vector<19x16x8xf32>
    %17 = arith.mulf %15, %16 : vector<19x16x8xf32>
    %18 = arith.addf %14, %17 : vector<19x16x8xf32>
    %c0_21 = arith.constant 0 : index
    %c0_22 = arith.constant 0 : index
    %c0_23 = arith.constant 0 : index
    %19 = vector.load %arg4[%c0_21, %c0_22, %c0_23] : memref<19x16x8xf32, #tpu.memory_space<vmem>>, vector<19x16x8xf32>
    tpu.vector_store %arg4[%c0_21, %c0_22, %c0_23], %18 {strides = array<i32>} : memref<19x16x8xf32, #tpu.memory_space<vmem>>, vector<19x16x8xf32>,
    %c0_24 = arith.constant 0 : index
    %c0_25 = arith.constant 0 : index
    %c0_26 = arith.constant 0 : index
    %20 = vector.load %arg4[%c0_24, %c0_25, %c0_26] : memref<19x16x8xf32, #tpu.memory_space<vmem>>, vector<16x16x8xf32>
    %cst_27 = arith.constant 1.250000e-01 : f32
    %21 = vector.broadcast %cst_27 : f32 to vector<16x16x8xf32>
    %22 = arith.mulf %20, %21 : vector<16x16x8xf32>
    %c1_28 = arith.constant 1 : index
    %c0_29 = arith.constant 0 : index
    %c0_30 = arith.constant 0 : index
    %23 = vector.load %arg4[%c1_28, %c0_29, %c0_30] : memref<19x16x8xf32, #tpu.memory_space<vmem>>, vector<16x16x8xf32>
    %cst_31 = arith.constant 3.750000e-01 : f32
    %24 = vector.broadcast %cst_31 : f32 to vector<16x16x8xf32>
    %25 = arith.mulf %23, %24 : vector<16x16x8xf32>
    %26 = arith.addf %22, %25 : vector<16x16x8xf32>
    %c2_32 = arith.constant 2 : index
    %c0_33 = arith.constant 0 : index
    %c0_34 = arith.constant 0 : index
    %27 = vector.load %arg4[%c2_32, %c0_33, %c0_34] : memref<19x16x8xf32, #tpu.memory_space<vmem>>, vector<16x16x8xf32>
    %cst_35 = arith.constant 3.750000e-01 : f32
    %28 = vector.broadcast %cst_35 : f32 to vector<16x16x8xf32>
    %29 = arith.mulf %27, %28 : vector<16x16x8xf32>
    %30 = arith.addf %26, %29 : vector<16x16x8xf32>
    %c3_36 = arith.constant 3 : index
    %c0_37 = arith.constant 0 : index
    %c0_38 = arith.constant 0 : index
    %31 = vector.load %arg4[%c3_36, %c0_37, %c0_38] : memref<19x16x8xf32, #tpu.memory_space<vmem>>, vector<16x16x8xf32>
    %cst_39 = arith.constant 1.250000e-01 : f32
    %32 = vector.broadcast %cst_39 : f32 to vector<16x16x8xf32>
    %33 = arith.mulf %31, %32 : vector<16x16x8xf32>
    %34 = arith.addf %30, %33 : vector<16x16x8xf32>
    %c0_40 = arith.constant 0 : index
    %c0_41 = arith.constant 0 : index
    %c0_42 = arith.constant 0 : index
    %35 = vector.load %arg2[%c0_40, %c0_41, %c0_42] : memref<16x16x8xf32, #tpu.memory_space<vmem>>, vector<16x16x8xf32>
    tpu.vector_store %arg2[%c0_40, %c0_41, %c0_42], %34 {strides = array<i32>} : memref<16x16x8xf32, #tpu.memory_space<vmem>>, vector<16x16x8xf32>,
    return
  }
  func.func @transform_0(%arg0: i32) -> (i32, i32, i32) {
    %c0_i32 = arith.constant 0 : i32
    %c0_i32_0 = arith.constant 0 : i32
    %c0_i32_1 = arith.constant 0 : i32
    return %c0_i32, %c0_i32_0, %arg0 : i32, i32, i32
  }
  func.func @transform_1(%arg0: i32) -> (i32, i32, i32) {
    %c0_i32 = arith.constant 0 : i32
    %c0_i32_0 = arith.constant 0 : i32
    %c0_i32_1 = arith.constant 0 : i32
    return %c0_i32, %c0_i32_0, %arg0 : i32, i32, i32
  }
}

</mosaic_0001>

<llo_original>
// kernel: tpu_custom_call.1
$region0: #{tpu_custom_call.1}
  #allocation0 [shape = 'u32[]', space=smem, size = 0x4, offset = 0x4, fixed_abs, tag = 'smem constant byte address 0x4 - core index']
  #allocation1 [shape = 'u32[72,128]{1,0:T(1,128)}', space=vmem, size = 0x9000, scoped, tag = 'internal scratch']
  #allocation2 [shape = 'f32[19,19,8]{2,1,0:T(8,128)}', space=vmem, size = 0x39000, scoped, tag = 'scratch operand']
  #allocation3 [shape = 'f32[19,16,8]{2,1,0:T(8,128)}', space=vmem, size = 0x26000, scoped, tag = 'scratch operand']
  %s0 = inlined_call_operand.vmem [shape: f32[16,16,8], index: 0, kind: input, shape index: {}]
  %s1 = inlined_call_operand.vmem [shape: f32[16,16,8], index: 1, kind: output, shape index: {}]
  %s2 = sld [smem:[#allocation0]]
  $region14: #{tpu_custom_call.1} parent=0
    _
  %s4 = ssub.s32 1, %s2
  %s5 = scalar_select 0, %s4, %s2
  // Predicated region
  $region2: #{tpu_custom_call.1} parent=0 // pred_check
    _
  $region3: #{tpu_custom_call.1} parent=0 // pred_check_branch
    %7 = sbr.rel (0) target = $region5
  $region4: #{tpu_custom_call.1} parent=0 // pred_region
    _
  $region5: #{tpu_custom_call.1} parent=0 // pred_fallthru
    _
  %vm8 = vcmask 64512
  %9 = vst.msk [vmem:[#allocation2] sm:$0xff] %vm8, 0.0
  %10 = vst.msk [vmem:[#allocation2 + $0x8] sm:$0xff] %vm8, 0.0
  %vm11 = vcmask 59392
  %12 = vst.msk [vmem:[#allocation2 + $0x10] sm:$0x7] %vm11, 0.0
  %13 = vst.msk [vmem:[#allocation2 + $0x18] sm:$0xff] %vm8, 0.0
  %14 = vst.msk [vmem:[#allocation2 + $0x20] sm:$0xff] %vm8, 0.0
  %15 = vst.msk [vmem:[#allocation2 + $0x28] sm:$0x7] %vm11, 0.0
  %16 = vst.msk [vmem:[#allocation2 + $0x30] sm:$0xff] %vm8, 0.0
  %17 = vst.msk [vmem:[#allocation2 + $0x38] sm:$0xff] %vm8, 0.0
  %18 = vst.msk [vmem:[#allocation2 + $0x40] sm:$0x7] %vm11, 0.0
  %19 = vst.msk [vmem:[#allocation2 + $0x48] sm:$0xff] %vm8, 0.0
  %20 = vst.msk [vmem:[#allocation2 + $0x50] sm:$0xff] %vm8, 0.0
  %21 = vst.msk [vmem:[#allocation2 + $0x58] sm:$0x7] %vm11, 0.0
  %22 = vst.msk [vmem:[#allocation2 + $0x60] sm:$0xff] %vm8, 0.0
  %23 = vst.msk [vmem:[#allocation2 + $0x68] sm:$0xff] %vm8, 0.0
  %24 = vst.msk [vmem:[#allocation2 + $0x70] sm:$0x7] %vm11, 0.0
  %25 = vst.msk [vmem:[#allocation2 + $0x78] sm:$0xff] %vm8, 0.0
  %26 = vst.msk [vmem:[#allocation2 + $0x80] sm:$0xff] %vm8, 0.0
  %27 = vst.msk [vmem:[#allocation2 + $0x88] sm:$0x7] %vm11, 0.0
  %28 = vst.msk [vmem:[#allocation2 + $0x90] sm:$0xff] %vm8, 0.0
  %29 = vst.msk [vmem:[#allocation2 + $0x98] sm:$0xff] %vm8, 0.0
  %30 = vst.msk [vmem:[#allocation2 + $0xa0] sm:$0x7] %vm11, 0.0
  %31 = vst.msk [vmem:[#allocation2 + $0xa8] sm:$0xff] %vm8, 0.0
  %32 = vst.msk [vmem:[#allocation2 + $0xb0] sm:$0xff] %vm8, 0.0
  %33 = vst.msk [vmem:[#allocation2 + $0xb8] sm:$0x7] %vm11, 0.0
  %34 = vst.msk [vmem:[#allocation2 + $0xc0] sm:$0xff] %vm8, 0.0
  %35 = vst.msk [vmem:[#allocation2 + $0xc8] sm:$0xff] %vm8, 0.0
  %36 = vst.msk [vmem:[#allocation2 + $0xd0] sm:$0x7] %vm11, 0.0
  %37 = vst.msk [vmem:[#allocation2 + $0xd8] sm:$0xff] %vm8, 0.0
  %38 = vst.msk [vmem:[#allocation2 + $0xe0] sm:$0xff] %vm8, 0.0
  %39 = vst.msk [vmem:[#allocation2 + $0xe8] sm:$0x7] %vm11, 0.0
  %40 = vst.msk [vmem:[#allocation2 + $0xf0] sm:$0xff] %vm8, 0.0
  %41 = vst.msk [vmem:[#allocation2 + $0xf8] sm:$0xff] %vm8, 0.0
  %42 = vst.msk [vmem:[#allocation2 + $0x100] sm:$0x7] %vm11, 0.0
  %43 = vst.msk [vmem:[#allocation2 + $0x108] sm:$0xff] %vm8, 0.0
  %44 = vst.msk [vmem:[#allocation2 + $0x110] sm:$0xff] %vm8, 0.0
  %45 = vst.msk [vmem:[#allocation2 + $0x118] sm:$0x7] %vm11, 0.0
  %46 = vst.msk [vmem:[#allocation2 + $0x120] sm:$0xff] %vm8, 0.0
  %47 = vst.msk [vmem:[#allocation2 + $0x128] sm:$0xff] %vm8, 0.0
  %48 = vst.msk [vmem:[#allocation2 + $0x130] sm:$0x7] %vm11, 0.0
  %49 = vst.msk [vmem:[#allocation2 + $0x138] sm:$0xff] %vm8, 0.0
  %50 = vst.msk [vmem:[#allocation2 + $0x140] sm:$0xff] %vm8, 0.0
  %51 = vst.msk [vmem:[#allocation2 + $0x148] sm:$0x7] %vm11, 0.0
  %52 = vst.msk [vmem:[#allocation2 + $0x150] sm:$0xff] %vm8, 0.0
  %53 = vst.msk [vmem:[#allocation2 + $0x158] sm:$0xff] %vm8, 0.0
  %54 = vst.msk [vmem:[#allocation2 + $0x160] sm:$0x7] %vm11, 0.0
  %55 = vst.msk [vmem:[#allocation2 + $0x168] sm:$0xff] %vm8, 0.0
  %56 = vst.msk [vmem:[#allocation2 + $0x170] sm:$0xff] %vm8, 0.0
  %57 = vst.msk [vmem:[#allocation2 + $0x178] sm:$0x7] %vm11, 0.0
  %58 = vst.msk [vmem:[#allocation2 + $0x180] sm:$0xff] %vm8, 0.0
  %59 = vst.msk [vmem:[#allocation2 + $0x188] sm:$0xff] %vm8, 0.0
  %60 = vst.msk [vmem:[#allocation2 + $0x190] sm:$0x7] %vm11, 0.0
  %61 = vst.msk [vmem:[#allocation2 + $0x198] sm:$0xff] %vm8, 0.0
  %62 = vst.msk [vmem:[#allocation2 + $0x1a0] sm:$0xff] %vm8, 0.0
  %63 = vst.msk [vmem:[#allocation2 + $0x1a8] sm:$0x7] %vm11, 0.0
  %64 = vst.msk [vmem:[#allocation2 + $0x1b0] sm:$0xff] %vm8, 0.0
  %65 = vst.msk [vmem:[#allocation2 + $0x1b8] sm:$0xff] %vm8, 0.0
  %66 = vst.msk [vmem:[#allocation2 + $0x1c0] sm:$0x7] %vm11, 0.0
  %v67 = vld [vmem:[%s0] sm:$0xff]
  %v68 = vld [vmem:[%s0 + $0x8] sm:$0xff]
  %v69 = vld [vmem:[%s0 + $0x10] sm:$0xff]
  %v70 = vld [vmem:[%s0 + $0x18] sm:$0xff]
  %v71 = vld [vmem:[%s0 + $0x20] sm:$0xff]
  %v72 = vld [vmem:[%s0 + $0x28] sm:$0xff]
  %v73 = vld [vmem:[%s0 + $0x30] sm:$0xff]
  %v74 = vld [vmem:[%s0 + $0x38] sm:$0xff]
  %v75 = vld [vmem:[%s0 + $0x40] sm:$0xff]
  %v76 = vld [vmem:[%s0 + $0x48] sm:$0xff]
  %v77 = vld [vmem:[%s0 + $0x50] sm:$0xff]
  %v78 = vld [vmem:[%s0 + $0x58] sm:$0xff]
  %v79 = vld [vmem:[%s0 + $0x60] sm:$0xff]
  %v80 = vld [vmem:[%s0 + $0x68] sm:$0xff]
  %v81 = vld [vmem:[%s0 + $0x70] sm:$0xff]
  %v82 = vld [vmem:[%s0 + $0x78] sm:$0xff]
  %v83 = vld [vmem:[%s0 + $0x80] sm:$0xff]
  %v84 = vld [vmem:[%s0 + $0x88] sm:$0xff]
  %v85 = vld [vmem:[%s0 + $0x90] sm:$0xff]
  %v86 = vld [vmem:[%s0 + $0x98] sm:$0xff]
  %v87 = vld [vmem:[%s0 + $0xa0] sm:$0xff]
  %v88 = vld [vmem:[%s0 + $0xa8] sm:$0xff]
  %v89 = vld [vmem:[%s0 + $0xb0] sm:$0xff]
  %v90 = vld [vmem:[%s0 + $0xb8] sm:$0xff]
  %v91 = vld [vmem:[%s0 + $0xc0] sm:$0xff]
  %v92 = vld [vmem:[%s0 + $0xc8] sm:$0xff]
  %v93 = vld [vmem:[%s0 + $0xd0] sm:$0xff]
  %v94 = vld [vmem:[%s0 + $0xd8] sm:$0xff]
  %v95 = vld [vmem:[%s0 + $0xe0] sm:$0xff]
  %v96 = vld [vmem:[%s0 + $0xe8] sm:$0xff]
  %v97 = vld [vmem:[%s0 + $0xf0] sm:$0xff]
  %v98 = vld [vmem:[%s0 + $0xf8] sm:$0xff]
  %s99 = scalar_lea.vmem [#allocation2], 48
  %100 = vst.msk [vmem:[%s99 + $0x2] sm:$0xff] %vm8, %v67
  %101 = vst.msk [vmem:[%s99 + $0xa] sm:$0xff] %vm8, %v68
  %102 = vst.msk [vmem:[%s99 + $0x1a] sm:$0xff] %vm8, %v69
  %103 = vst.msk [vmem:[%s99 + $0x22] sm:$0xff] %vm8, %v70
  %104 = vst.msk [vmem:[%s99 + $0x32] sm:$0xff] %vm8, %v71
  %105 = vst.msk [vmem:[%s99 + $0x3a] sm:$0xff] %vm8, %v72
  %106 = vst.msk [vmem:[%s99 + $0x4a] sm:$0xff] %vm8, %v73
  %107 = vst.msk [vmem:[%s99 + $0x52] sm:$0xff] %vm8, %v74
  %108 = vst.msk [vmem:[%s99 + $0x62] sm:$0xff] %vm8, %v75
  %109 = vst.msk [vmem:[%s99 + $0x6a] sm:$0xff] %vm8, %v76
  %110 = vst.msk [vmem:[%s99 + $0x7a] sm:$0xff] %vm8, %v77
  %111 = vst.msk [vmem:[%s99 + $0x82] sm:$0xff] %vm8, %v78
  %112 = vst.msk [vmem:[%s99 + $0x92] sm:$0xff] %vm8, %v79
  %113 = vst.msk [vmem:[%s99 + $0x9a] sm:$0xff] %vm8, %v80
  %114 = vst.msk [vmem:[%s99 + $0xaa] sm:$0xff] %vm8, %v81
  %115 = vst.msk [vmem:[%s99 + $0xb2] sm:$0xff] %vm8, %v82
  %116 = vst.msk [vmem:[%s99 + $0xc2] sm:$0xff] %vm8, %v83
  %117 = vst.msk [vmem:[%s99 + $0xca] sm:$0xff] %vm8, %v84
  %118 = vst.msk [vmem:[%s99 + $0xda] sm:$0xff] %vm8, %v85
  %119 = vst.msk [vmem:[%s99 + $0xe2] sm:$0xff] %vm8, %v86
  %120 = vst.msk [vmem:[%s99 + $0xf2] sm:$0xff] %vm8, %v87
  %121 = vst.msk [vmem:[%s99 + $0xfa] sm:$0xff] %vm8, %v88
  %122 = vst.msk [vmem:[%s99 + $0x10a] sm:$0xff] %vm8, %v89
  %123 = vst.msk [vmem:[%s99 + $0x112] sm:$0xff] %vm8, %v90
  %124 = vst.msk [vmem:[%s99 + $0x122] sm:$0xff] %vm8, %v91
  %125 = vst.msk [vmem:[%s99 + $0x12a] sm:$0xff] %vm8, %v92
  %126 = vst.msk [vmem:[%s99 + $0x13a] sm:$0xff] %vm8, %v93
  %127 = vst.msk [vmem:[%s99 + $0x142] sm:$0xff] %vm8, %v94
  %128 = vst.msk [vmem:[%s99 + $0x152] sm:$0xff] %vm8, %v95
  %129 = vst.msk [vmem:[%s99 + $0x15a] sm:$0xff] %vm8, %v96
  %130 = vst.msk [vmem:[%s99 + $0x16a] sm:$0xff] %vm8, %v97
  %131 = vst.msk [vmem:[%s99 + $0x172] sm:$0xff] %vm8, %v98
  %v132 = vld [vmem:[#allocation2] sm:$0xff]
  %v133 = vld [vmem:[#allocation2 + $0x8] sm:$0xff]
  %v134 = vld [vmem:[#allocation2 + $0x18] sm:$0xff]
  %v135 = vld [vmem:[#allocation2 + $0x20] sm:$0xff]
  %v136 = vld [vmem:[#allocation2 + $0x30] sm:$0xff]
  %v137 = vld [vmem:[#allocation2 + $0x38] sm:$0xff]
  %v138 = vld [vmem:[#allocation2 + $0x48] sm:$0xff]
  %v139 = vld [vmem:[#allocation2 + $0x50] sm:$0xff]
  %v140 = vld [vmem:[#allocation2 + $0x60] sm:$0xff]
  %v141 = vld [vmem:[#allocation2 + $0x68] sm:$0xff]
  %v142 = vld [vmem:[#allocation2 + $0x78] sm:$0xff]
  %v143 = vld [vmem:[#allocation2 + $0x80] sm:$0xff]
  %v144 = vld [vmem:[#allocation2 + $0x90] sm:$0xff]
  %v145 = vld [vmem:[#allocation2 + $0x98] sm:$0xff]
  %v146 = vld [vmem:[#allocation2 + $0xa8] sm:$0xff]
  %v147 = vld [vmem:[#allocation2 + $0xb0] sm:$0xff]
  %v148 = vld [vmem:[#allocation2 + $0xc0] sm:$0xff]
  %v149 = vld [vmem:[#allocation2 + $0xc8] sm:$0xff]
  %v150 = vld [vmem:[#allocation2 + $0xd8] sm:$0xff]
  %v151 = vld [vmem:[#allocation2 + $0xe0] sm:$0xff]
  %v152 = vld [vmem:[#allocation2 + $0xf0] sm:$0xff]
  %v153 = vld [vmem:[#allocation2 + $0xf8] sm:$0xff]
  %v154 = vld [vmem:[#allocation2 + $0x108] sm:$0xff]
  %v155 = vld [vmem:[#allocation2 + $0x110] sm:$0xff]
  %v156 = vld [vmem:[#allocation2 + $0x120] sm:$0xff]
  %v157 = vld [vmem:[#allocation2 + $0x128] sm:$0xff]
  %v158 = vld [vmem:[#allocation2 + $0x138] sm:$0xff]
  %v159 = vld [vmem:[#allocation2 + $0x140] sm:$0xff]
  %v160 = vld [vmem:[#allocation2 + $0x150] sm:$0xff]
  %v161 = vld [vmem:[#allocation2 + $0x158] sm:$0xff]
  %v162 = vld [vmem:[#allocation2 + $0x168] sm:$0xff]
  %v163 = vld [vmem:[#allocation2 + $0x170] sm:$0xff]
  %v164 = vld [vmem:[#allocation2 + $0x180] sm:$0xff]
  %v165 = vld [vmem:[#allocation2 + $0x188] sm:$0xff]
  %v166 = vld [vmem:[#allocation2 + $0x198] sm:$0xff]
  %v167 = vld [vmem:[#allocation2 + $0x1a0] sm:$0xff]
  %v168 = vld [vmem:[#allocation2 + $0x1b0] sm:$0xff]
  %v169 = vld [vmem:[#allocation2 + $0x1b8] sm:$0xff]
  %v170 = vmul.f32 %v132, 0.125
  %v171 = vmul.f32 %v133, 0.125
  %v172 = vmul.f32 %v134, 0.125
  %v173 = vmul.f32 %v135, 0.125
  %v174 = vmul.f32 %v136, 0.125
  %v175 = vmul.f32 %v137, 0.125
  %v176 = vmul.f32 %v138, 0.125
  %v177 = vmul.f32 %v139, 0.125
  %v178 = vmul.f32 %v140, 0.125
  %v179 = vmul.f32 %v141, 0.125
  %v180 = vmul.f32 %v142, 0.125
  %v181 = vmul.f32 %v143, 0.125
  %v182 = vmul.f32 %v144, 0.125
  %v183 = vmul.f32 %v145, 0.125
  %v184 = vmul.f32 %v146, 0.125
  %v185 = vmul.f32 %v147, 0.125
  %v186 = vmul.f32 %v148, 0.125
  %v187 = vmul.f32 %v149, 0.125
  %v188 = vmul.f32 %v150, 0.125
  %v189 = vmul.f32 %v151, 0.125
  %v190 = vmul.f32 %v152, 0.125
  %v191 = vmul.f32 %v153, 0.125
  %v192 = vmul.f32 %v154, 0.125
  %v193 = vmul.f32 %v155, 0.125
  %v194 = vmul.f32 %v156, 0.125
  %v195 = vmul.f32 %v157, 0.125
  %v196 = vmul.f32 %v158, 0.125
  %v197 = vmul.f32 %v159, 0.125
  %v198 = vmul.f32 %v160, 0.125
  %v199 = vmul.f32 %v161, 0.125
  %v200 = vmul.f32 %v162, 0.125
  %v201 = vmul.f32 %v163, 0.125
  %v202 = vmul.f32 %v164, 0.125
  %v203 = vmul.f32 %v165, 0.125
  %v204 = vmul.f32 %v166, 0.125
  %v205 = vmul.f32 %v167, 0.125
  %v206 = vmul.f32 %v168, 0.125
  %v207 = vmul.f32 %v169, 0.125
  %v208 = vld [vmem:[#allocation2 + $0x1] sm:$0xff]
  %v209 = vld [vmem:[#allocation2 + $0x9] sm:$0xff]
  %v210 = vld [vmem:[#allocation2 + $0x19] sm:$0xff]
  %v211 = vld [vmem:[#allocation2 + $0x21] sm:$0xff]
  %v212 = vld [vmem:[#allocation2 + $0x31] sm:$0xff]
  %v213 = vld [vmem:[#allocation2 + $0x39] sm:$0xff]
  %v214 = vld [vmem:[#allocation2 + $0x49] sm:$0xff]
  %v215 = vld [vmem:[#allocation2 + $0x51] sm:$0xff]
  %v216 = vld [vmem:[#allocation2 + $0x61] sm:$0xff]
  %v217 = vld [vmem:[#allocation2 + $0x69] sm:$0xff]
  %v218 = vld [vmem:[#allocation2 + $0x79] sm:$0xff]
  %v219 = vld [vmem:[#allocation2 + $0x81] sm:$0xff]
  %v220 = vld [vmem:[#allocation2 + $0x91] sm:$0xff]
  %v221 = vld [vmem:[#allocation2 + $0x99] sm:$0xff]
  %v222 = vld [vmem:[#allocation2 + $0xa9] sm:$0xff]
  %v223 = vld [vmem:[#allocation2 + $0xb1] sm:$0xff]
  %v224 = vld [vmem:[#allocation2 + $0xc1] sm:$0xff]
  %v225 = vld [vmem:[#allocation2 + $0xc9] sm:$0xff]
  %v226 = vld [vmem:[#allocation2 + $0xd9] sm:$0xff]
  %v227 = vld [vmem:[#allocation2 + $0xe1] sm:$0xff]
  %v228 = vld [vmem:[#allocation2 + $0xf1] sm:$0xff]
  %v229 = vld [vmem:[#allocation2 + $0xf9] sm:$0xff]
  %v230 = vld [vmem:[#allocation2 + $0x109] sm:$0xff]
  %v231 = vld [vmem:[#allocation2 + $0x111] sm:$0xff]
  %v232 = vld [vmem:[#allocation2 + $0x121] sm:$0xff]
  %v233 = vld [vmem:[#allocation2 + $0x129] sm:$0xff]
  %v234 = vld [vmem:[#allocation2 + $0x139] sm:$0xff]
  %v235 = vld [vmem:[#allocation2 + $0x141] sm:$0xff]
  %v236 = vld [vmem:[#allocation2 + $0x151] sm:$0xff]
  %v237 = vld [vmem:[#allocation2 + $0x159] sm:$0xff]
  %v238 = vld [vmem:[#allocation2 + $0x169] sm:$0xff]
  %v239 = vld [vmem:[#allocation2 + $0x171] sm:$0xff]
  %v240 = vld [vmem:[#allocation2 + $0x181] sm:$0xff]
  %v241 = vld [vmem:[#allocation2 + $0x189] sm:$0xff]
  %v242 = vld [vmem:[#allocation2 + $0x199] sm:$0xff]
  %v243 = vld [vmem:[#allocation2 + $0x1a1] sm:$0xff]
  %v244 = vld [vmem:[#allocation2 + $0x1b1] sm:$0xff]
  %v245 = vld [vmem:[#allocation2 + $0x1b9] sm:$0xff]
  %v246 = vmul.f32 %v208, 0.375
  %v247 = vmul.f32 %v209, 0.375
  %v248 = vmul.f32 %v210, 0.375
  %v249 = vmul.f32 %v211, 0.375
  %v250 = vmul.f32 %v212, 0.375
  %v251 = vmul.f32 %v213, 0.375
  %v252 = vmul.f32 %v214, 0.375
  %v253 = vmul.f32 %v215, 0.375
  %v254 = vmul.f32 %v216, 0.375
  %v255 = vmul.f32 %v217, 0.375
  %v256 = vmul.f32 %v218, 0.375
  %v257 = vmul.f32 %v219, 0.375
  %v258 = vmul.f32 %v220, 0.375
  %v259 = vmul.f32 %v221, 0.375
  %v260 = vmul.f32 %v222, 0.375
  %v261 = vmul.f32 %v223, 0.375
  %v262 = vmul.f32 %v224, 0.375
  %v263 = vmul.f32 %v225, 0.375
  %v264 = vmul.f32 %v226, 0.375
  %v265 = vmul.f32 %v227, 0.375
  %v266 = vmul.f32 %v228, 0.375
  %v267 = vmul.f32 %v229, 0.375
  %v268 = vmul.f32 %v230, 0.375
  %v269 = vmul.f32 %v231, 0.375
  %v270 = vmul.f32 %v232, 0.375
  %v271 = vmul.f32 %v233, 0.375
  %v272 = vmul.f32 %v234, 0.375
  %v273 = vmul.f32 %v235, 0.375
  %v274 = vmul.f32 %v236, 0.375
  %v275 = vmul.f32 %v237, 0.375
  %v276 = vmul.f32 %v238, 0.375
  %v277 = vmul.f32 %v239, 0.375
  %v278 = vmul.f32 %v240, 0.375
  %v279 = vmul.f32 %v241, 0.375
  %v280 = vmul.f32 %v242, 0.375
  %v281 = vmul.f32 %v243, 0.375
  %v282 = vmul.f32 %v244, 0.375
  %v283 = vmul.f32 %v245, 0.375
  %v284 = vadd.f32 %v170, %v246
  %v285 = vadd.f32 %v171, %v247
  %v286 = vadd.f32 %v172, %v248
  %v287 = vadd.f32 %v173, %v249
  %v288 = vadd.f32 %v174, %v250
  %v289 = vadd.f32 %v175, %v251
  %v290 = vadd.f32 %v176, %v252
  %v291 = vadd.f32 %v177, %v253
  %v292 = vadd.f32 %v178, %v254
  %v293 = vadd.f32 %v179, %v255
  %v294 = vadd.f32 %v180, %v256
  %v295 = vadd.f32 %v181, %v257
  %v296 = vadd.f32 %v182, %v258
  %v297 = vadd.f32 %v183, %v259
  %v298 = vadd.f32 %v184, %v260
  %v299 = vadd.f32 %v185, %v261
  %v300 = vadd.f32 %v186, %v262
  %v301 = vadd.f32 %v187, %v263
  %v302 = vadd.f32 %v188, %v264
  %v303 = vadd.f32 %v189, %v265
  %v304 = vadd.f32 %v190, %v266
  %v305 = vadd.f32 %v191, %v267
  %v306 = vadd.f32 %v192, %v268
  %v307 = vadd.f32 %v193, %v269
  %v308 = vadd.f32 %v194, %v270
  %v309 = vadd.f32 %v195, %v271
  %v310 = vadd.f32 %v196, %v272
  %v311 = vadd.f32 %v197, %v273
  %v312 = vadd.f32 %v198, %v274
  %v313 = vadd.f32 %v199, %v275
  %v314 = vadd.f32 %v200, %v276
  %v315 = vadd.f32 %v201, %v277
  %v316 = vadd.f32 %v202, %v278
  %v317 = vadd.f32 %v203, %v279
  %v318 = vadd.f32 %v204, %v280
  %v319 = vadd.f32 %v205, %v281
  %v320 = vadd.f32 %v206, %v282
  %v321 = vadd.f32 %v207, %v283
  %v322 = vld [vmem:[#allocation2 + $0x2] sm:$0xff]
  %v323 = vld [vmem:[#allocation2 + $0xa] sm:$0xff]
  %v324 = vld [vmem:[#allocation2 + $0x1a] sm:$0xff]
  %v325 = vld [vmem:[#allocation2 + $0x22] sm:$0xff]
  %v326 = vld [vmem:[#allocation2 + $0x32] sm:$0xff]
  %v327 = vld [vmem:[#allocation2 + $0x3a] sm:$0xff]
  %v328 = vld [vmem:[#allocation2 + $0x4a] sm:$0xff]
  %v329 = vld [vmem:[#allocation2 + $0x52] sm:$0xff]
  %v330 = vld [vmem:[#allocation2 + $0x62] sm:$0xff]
  %v331 = vld [vmem:[#allocation2 + $0x6a] sm:$0xff]
  %v332 = vld [vmem:[#allocation2 + $0x7a] sm:$0xff]
  %v333 = vld [vmem:[#allocation2 + $0x82] sm:$0xff]
  %v334 = vld [vmem:[#allocation2 + $0x92] sm:$0xff]
  %v335 = vld [vmem:[#allocation2 + $0x9a] sm:$0xff]
  %v336 = vld [vmem:[#allocation2 + $0xaa] sm:$0xff]
  %v337 = vld [vmem:[#allocation2 + $0xb2] sm:$0xff]
  %v338 = vld [vmem:[#allocation2 + $0xc2] sm:$0xff]
  %v339 = vld [vmem:[#allocation2 + $0xca] sm:$0xff]
  %v340 = vld [vmem:[#allocation2 + $0xda] sm:$0xff]
  %v341 = vld [vmem:[#allocation2 + $0xe2] sm:$0xff]
  %v342 = vld [vmem:[#allocation2 + $0xf2] sm:$0xff]
  %v343 = vld [vmem:[#allocation2 + $0xfa] sm:$0xff]
  %v344 = vld [vmem:[#allocation2 + $0x10a] sm:$0xff]
  %v345 = vld [vmem:[#allocation2 + $0x112] sm:$0xff]
  %v346 = vld [vmem:[#allocation2 + $0x122] sm:$0xff]
  %v347 = vld [vmem:[#allocation2 + $0x12a] sm:$0xff]
  %v348 = vld [vmem:[#allocation2 + $0x13a] sm:$0xff]
  %v349 = vld [vmem:[#allocation2 + $0x142] sm:$0xff]
  %v350 = vld [vmem:[#allocation2 + $0x152] sm:$0xff]
  %v351 = vld [vmem:[#allocation2 + $0x15a] sm:$0xff]
  %v352 = vld [vmem:[#allocation2 + $0x16a] sm:$0xff]
  %v353 = vld [vmem:[#allocation2 + $0x172] sm:$0xff]
  %v354 = vld [vmem:[#allocation2 + $0x182] sm:$0xff]
  %v355 = vld [vmem:[#allocation2 + $0x18a] sm:$0xff]
  %v356 = vld [vmem:[#allocation2 + $0x19a] sm:$0xff]
  %v357 = vld [vmem:[#allocation2 + $0x1a2] sm:$0xff]
  %v358 = vld [vmem:[#allocation2 + $0x1b2] sm:$0xff]
  %v359 = vld [vmem:[#allocation2 + $0x1ba] sm:$0xff]
  %v360 = vmul.f32 %v322, 0.375
  %v361 = vmul.f32 %v323, 0.375
  %v362 = vmul.f32 %v324, 0.375
  %v363 = vmul.f32 %v325, 0.375
  %v364 = vmul.f32 %v326, 0.375
  %v365 = vmul.f32 %v327, 0.375
  %v366 = vmul.f32 %v328, 0.375
  %v367 = vmul.f32 %v329, 0.375
  %v368 = vmul.f32 %v330, 0.375
  %v369 = vmul.f32 %v331, 0.375
  %v370 = vmul.f32 %v332, 0.375
  %v371 = vmul.f32 %v333, 0.375
  %v372 = vmul.f32 %v334, 0.375
  %v373 = vmul.f32 %v335, 0.375
  %v374 = vmul.f32 %v336, 0.375
  %v375 = vmul.f32 %v337, 0.375
  %v376 = vmul.f32 %v338, 0.375
  %v377 = vmul.f32 %v339, 0.375
  %v378 = vmul.f32 %v340, 0.375
  %v379 = vmul.f32 %v341, 0.375
  %v380 = vmul.f32 %v342, 0.375
  %v381 = vmul.f32 %v343, 0.375
  %v382 = vmul.f32 %v344, 0.375
  %v383 = vmul.f32 %v345, 0.375
  %v384 = vmul.f32 %v346, 0.375
  %v385 = vmul.f32 %v347, 0.375
  %v386 = vmul.f32 %v348, 0.375
  %v387 = vmul.f32 %v349, 0.375
  %v388 = vmul.f32 %v350, 0.375
  %v389 = vmul.f32 %v351, 0.375
  %v390 = vmul.f32 %v352, 0.375
  %v391 = vmul.f32 %v353, 0.375
  %v392 = vmul.f32 %v354, 0.375
  %v393 = vmul.f32 %v355, 0.375
  %v394 = vmul.f32 %v356, 0.375
  %v395 = vmul.f32 %v357, 0.375
  %v396 = vmul.f32 %v358, 0.375
  %v397 = vmul.f32 %v359, 0.375
  %v398 = vadd.f32 %v284, %v360
  %v399 = vadd.f32 %v285, %v361
  %v400 = vadd.f32 %v286, %v362
  %v401 = vadd.f32 %v287, %v363
  %v402 = vadd.f32 %v288, %v364
  %v403 = vadd.f32 %v289, %v365
  %v404 = vadd.f32 %v290, %v366
  %v405 = vadd.f32 %v291, %v367
  %v406 = vadd.f32 %v292, %v368
  %v407 = vadd.f32 %v293, %v369
  %v408 = vadd.f32 %v294, %v370
  %v409 = vadd.f32 %v295, %v371
  %v410 = vadd.f32 %v296, %v372
  %v411 = vadd.f32 %v297, %v373
  %v412 = vadd.f32 %v298, %v374
  %v413 = vadd.f32 %v299, %v375
  %v414 = vadd.f32 %v300, %v376
  %v415 = vadd.f32 %v301, %v377
  %v416 = vadd.f32 %v302, %v378
  %v417 = vadd.f32 %v303, %v379
  %v418 = vadd.f32 %v304, %v380
  %v419 = vadd.f32 %v305, %v381
  %v420 = vadd.f32 %v306, %v382
  %v421 = vadd.f32 %v307, %v383
  %v422 = vadd.f32 %v308, %v384
  %v423 = vadd.f32 %v309, %v385
  %v424 = vadd.f32 %v310, %v386
  %v425 = vadd.f32 %v311, %v387
  %v426 = vadd.f32 %v312, %v388
  %v427 = vadd.f32 %v313, %v389
  %v428 = vadd.f32 %v314, %v390
  %v429 = vadd.f32 %v315, %v391
  %v430 = vadd.f32 %v316, %v392
  %v431 = vadd.f32 %v317, %v393
  %v432 = vadd.f32 %v318, %v394
  %v433 = vadd.f32 %v319, %v395
  %v434 = vadd.f32 %v320, %v396
  %v435 = vadd.f32 %v321, %v397
  %v436 = vld [vmem:[#allocation2 + $0x3] sm:$0xff]
  %v437 = vld [vmem:[#allocation2 + $0xb] sm:$0xff]
  %v438 = vld [vmem:[#allocation2 + $0x1b] sm:$0xff]
  %v439 = vld [vmem:[#allocation2 + $0x23] sm:$0xff]
  %v440 = vld [vmem:[#allocation2 + $0x33] sm:$0xff]
  %v441 = vld [vmem:[#allocation2 + $0x3b] sm:$0xff]
  %v442 = vld [vmem:[#allocation2 + $0x4b] sm:$0xff]
  %v443 = vld [vmem:[#allocation2 + $0x53] sm:$0xff]
  %v444 = vld [vmem:[#allocation2 + $0x63] sm:$0xff]
  %v445 = vld [vmem:[#allocation2 + $0x6b] sm:$0xff]
  %v446 = vld [vmem:[#allocation2 + $0x7b] sm:$0xff]
  %v447 = vld [vmem:[#allocation2 + $0x83] sm:$0xff]
  %v448 = vld [vmem:[#allocation2 + $0x93] sm:$0xff]
  %v449 = vld [vmem:[#allocation2 + $0x9b] sm:$0xff]
  %v450 = vld [vmem:[#allocation2 + $0xab] sm:$0xff]
  %v451 = vld [vmem:[#allocation2 + $0xb3] sm:$0xff]
  %v452 = vld [vmem:[#allocation2 + $0xc3] sm:$0xff]
  %v453 = vld [vmem:[#allocation2 + $0xcb] sm:$0xff]
  %v454 = vld [vmem:[#allocation2 + $0xdb] sm:$0xff]
  %v455 = vld [vmem:[#allocation2 + $0xe3] sm:$0xff]
  %v456 = vld [vmem:[#allocation2 + $0xf3] sm:$0xff]
  %v457 = vld [vmem:[#allocation2 + $0xfb] sm:$0xff]
  %v458 = vld [vmem:[#allocation2 + $0x10b] sm:$0xff]
  %v459 = vld [vmem:[#allocation2 + $0x113] sm:$0xff]
  %v460 = vld [vmem:[#allocation2 + $0x123] sm:$0xff]
  %v461 = vld [vmem:[#allocation2 + $0x12b] sm:$0xff]
  %v462 = vld [vmem:[#allocation2 + $0x13b] sm:$0xff]
  %v463 = vld [vmem:[#allocation2 + $0x143] sm:$0xff]
  %v464 = vld [vmem:[#allocation2 + $0x153] sm:$0xff]
  %v465 = vld [vmem:[#allocation2 + $0x15b] sm:$0xff]
  %v466 = vld [vmem:[#allocation2 + $0x16b] sm:$0xff]
  %v467 = vld [vmem:[#allocation2 + $0x173] sm:$0xff]
  %v468 = vld [vmem:[#allocation2 + $0x183] sm:$0xff]
  %v469 = vld [vmem:[#allocation2 + $0x18b] sm:$0xff]
  %v470 = vld [vmem:[#allocation2 + $0x19b] sm:$0xff]
  %v471 = vld [vmem:[#allocation2 + $0x1a3] sm:$0xff]
  %v472 = vld [vmem:[#allocation2 + $0x1b3] sm:$0xff]
  %v473 = vld [vmem:[#allocation2 + $0x1bb] sm:$0xff]
  %v474 = vmul.f32 %v436, 0.125
  %v475 = vmul.f32 %v437, 0.125
  %v476 = vmul.f32 %v438, 0.125
  %v477 = vmul.f32 %v439, 0.125
  %v478 = vmul.f32 %v440, 0.125
  %v479 = vmul.f32 %v441, 0.125
  %v480 = vmul.f32 %v442, 0.125
  %v481 = vmul.f32 %v443, 0.125
  %v482 = vmul.f32 %v444, 0.125
  %v483 = vmul.f32 %v445, 0.125
  %v484 = vmul.f32 %v446, 0.125
  %v485 = vmul.f32 %v447, 0.125
  %v486 = vmul.f32 %v448, 0.125
  %v487 = vmul.f32 %v449, 0.125
  %v488 = vmul.f32 %v450, 0.125
  %v489 = vmul.f32 %v451, 0.125
  %v490 = vmul.f32 %v452, 0.125
  %v491 = vmul.f32 %v453, 0.125
  %v492 = vmul.f32 %v454, 0.125
  %v493 = vmul.f32 %v455, 0.125
  %v494 = vmul.f32 %v456, 0.125
  %v495 = vmul.f32 %v457, 0.125
  %v496 = vmul.f32 %v458, 0.125
  %v497 = vmul.f32 %v459, 0.125
  %v498 = vmul.f32 %v460, 0.125
  %v499 = vmul.f32 %v461, 0.125
  %v500 = vmul.f32 %v462, 0.125
  %v501 = vmul.f32 %v463, 0.125
  %v502 = vmul.f32 %v464, 0.125
  %v503 = vmul.f32 %v465, 0.125
  %v504 = vmul.f32 %v466, 0.125
  %v505 = vmul.f32 %v467, 0.125
  %v506 = vmul.f32 %v468, 0.125
  %v507 = vmul.f32 %v469, 0.125
  %v508 = vmul.f32 %v470, 0.125
  %v509 = vmul.f32 %v471, 0.125
  %v510 = vmul.f32 %v472, 0.125
  %v511 = vmul.f32 %v473, 0.125
  %v512 = vadd.f32 %v398, %v474
  %v513 = vadd.f32 %v399, %v475
  %v514 = vadd.f32 %v400, %v476
  %v515 = vadd.f32 %v401, %v477
  %v516 = vadd.f32 %v402, %v478
  %v517 = vadd.f32 %v403, %v479
  %v518 = vadd.f32 %v404, %v480
  %v519 = vadd.f32 %v405, %v481
  %v520 = vadd.f32 %v406, %v482
  %v521 = vadd.f32 %v407, %v483
  %v522 = vadd.f32 %v408, %v484
  %v523 = vadd.f32 %v409, %v485
  %v524 = vadd.f32 %v410, %v486
  %v525 = vadd.f32 %v411, %v487
  %v526 = vadd.f32 %v412, %v488
  %v527 = vadd.f32 %v413, %v489
  %v528 = vadd.f32 %v414, %v490
  %v529 = vadd.f32 %v415, %v491
  %v530 = vadd.f32 %v416, %v492
  %v531 = vadd.f32 %v417, %v493
  %v532 = vadd.f32 %v418, %v494
  %v533 = vadd.f32 %v419, %v495
  %v534 = vadd.f32 %v420, %v496
  %v535 = vadd.f32 %v421, %v497
  %v536 = vadd.f32 %v422, %v498
  %v537 = vadd.f32 %v423, %v499
  %v538 = vadd.f32 %v424, %v500
  %v539 = vadd.f32 %v425, %v501
  %v540 = vadd.f32 %v426, %v502
  %v541 = vadd.f32 %v427, %v503
  %v542 = vadd.f32 %v428, %v504
  %v543 = vadd.f32 %v429, %v505
  %v544 = vadd.f32 %v430, %v506
  %v545 = vadd.f32 %v431, %v507
  %v546 = vadd.f32 %v432, %v508
  %v547 = vadd.f32 %v433, %v509
  %v548 = vadd.f32 %v434, %v510
  %v549 = vadd.f32 %v435, %v511
  %550 = vst.msk [vmem:[#allocation3] sm:$0xff] %vm8, %v512
  %551 = vst.msk [vmem:[#allocation3 + $0x8] sm:$0xff] %vm8, %v513
  %552 = vst.msk [vmem:[#allocation3 + $0x10] sm:$0xff] %vm8, %v514
  %553 = vst.msk [vmem:[#allocation3 + $0x18] sm:$0xff] %vm8, %v515
  %554 = vst.msk [vmem:[#allocation3 + $0x20] sm:$0xff] %vm8, %v516
  %555 = vst.msk [vmem:[#allocation3 + $0x28] sm:$0xff] %vm8, %v517
  %556 = vst.msk [vmem:[#allocation3 + $0x30] sm:$0xff] %vm8, %v518
  %557 = vst.msk [vmem:[#allocation3 + $0x38] sm:$0xff] %vm8, %v519
  %558 = vst.msk [vmem:[#allocation3 + $0x40] sm:$0xff] %vm8, %v520
  %559 = vst.msk [vmem:[#allocation3 + $0x48] sm:$0xff] %vm8, %v521
  %560 = vst.msk [vmem:[#allocation3 + $0x50] sm:$0xff] %vm8, %v522
  %561 = vst.msk [vmem:[#allocation3 + $0x58] sm:$0xff] %vm8, %v523
  %562 = vst.msk [vmem:[#allocation3 + $0x60] sm:$0xff] %vm8, %v524
  %563 = vst.msk [vmem:[#allocation3 + $0x68] sm:$0xff] %vm8, %v525
  %564 = vst.msk [vmem:[#allocation3 + $0x70] sm:$0xff] %vm8, %v526
  %565 = vst.msk [vmem:[#allocation3 + $0x78] sm:$0xff] %vm8, %v527
  %566 = vst.msk [vmem:[#allocation3 + $0x80] sm:$0xff] %vm8, %v528
  %567 = vst.msk [vmem:[#allocation3 + $0x88] sm:$0xff] %vm8, %v529
  %568 = vst.msk [vmem:[#allocation3 + $0x90] sm:$0xff] %vm8, %v530
  %569 = vst.msk [vmem:[#allocation3 + $0x98] sm:$0xff] %vm8, %v531
  %570 = vst.msk [vmem:[#allocation3 + $0xa0] sm:$0xff] %vm8, %v532
  %571 = vst.msk [vmem:[#allocation3 + $0xa8] sm:$0xff] %vm8, %v533
  %572 = vst.msk [vmem:[#allocation3 + $0xb0] sm:$0xff] %vm8, %v534
  %573 = vst.msk [vmem:[#allocation3 + $0xb8] sm:$0xff] %vm8, %v535
  %574 = vst.msk [vmem:[#allocation3 + $0xc0] sm:$0xff] %vm8, %v536
  %575 = vst.msk [vmem:[#allocation3 + $0xc8] sm:$0xff] %vm8, %v537
  %576 = vst.msk [vmem:[#allocation3 + $0xd0] sm:$0xff] %vm8, %v538
  %577 = vst.msk [vmem:[#allocation3 + $0xd8] sm:$0xff] %vm8, %v539
  %578 = vst.msk [vmem:[#allocation3 + $0xe0] sm:$0xff] %vm8, %v540
  %579 = vst.msk [vmem:[#allocation3 + $0xe8] sm:$0xff] %vm8, %v541
  %580 = vst.msk [vmem:[#allocation3 + $0xf0] sm:$0xff] %vm8, %v542
  %581 = vst.msk [vmem:[#allocation3 + $0xf8] sm:$0xff] %vm8, %v543
  %582 = vst.msk [vmem:[#allocation3 + $0x100] sm:$0xff] %vm8, %v544
  %583 = vst.msk [vmem:[#allocation3 + $0x108] sm:$0xff] %vm8, %v545
  %584 = vst.msk [vmem:[#allocation3 + $0x110] sm:$0xff] %vm8, %v546
  %585 = vst.msk [vmem:[#allocation3 + $0x118] sm:$0xff] %vm8, %v547
  %586 = vst.msk [vmem:[#allocation3 + $0x120] sm:$0xff] %vm8, %v548
  %587 = vst.msk [vmem:[#allocation3 + $0x128] sm:$0xff] %vm8, %v549
  %v588 = vld [vmem:[#allocation3] sm:$0xff]
  %v589 = vld [vmem:[#allocation3 + $0x8] sm:$0xff]
  %v590 = vld [vmem:[#allocation3 + $0x10] sm:$0xff]
  %v591 = vld [vmem:[#allocation3 + $0x18] sm:$0xff]
  %v592 = vld [vmem:[#allocation3 + $0x20] sm:$0xff]
  %v593 = vld [vmem:[#allocation3 + $0x28] sm:$0xff]
  %v594 = vld [vmem:[#allocation3 + $0x30] sm:$0xff]
  %v595 = vld [vmem:[#allocation3 + $0x38] sm:$0xff]
  %v596 = vld [vmem:[#allocation3 + $0x40] sm:$0xff]
  %v597 = vld [vmem:[#allocation3 + $0x48] sm:$0xff]
  %v598 = vld [vmem:[#allocation3 + $0x50] sm:$0xff]
  %v599 = vld [vmem:[#allocation3 + $0x58] sm:$0xff]
  %v600 = vld [vmem:[#allocation3 + $0x60] sm:$0xff]
  %v601 = vld [vmem:[#allocation3 + $0x68] sm:$0xff]
  %v602 = vld [vmem:[#allocation3 + $0x70] sm:$0xff]
  %v603 = vld [vmem:[#allocation3 + $0x78] sm:$0xff]
  %v604 = vld [vmem:[#allocation3 + $0x80] sm:$0xff]
  %v605 = vld [vmem:[#allocation3 + $0x88] sm:$0xff]
  %v606 = vld [vmem:[#allocation3 + $0x90] sm:$0xff]
  %v607 = vld [vmem:[#allocation3 + $0x98] sm:$0xff]
  %v608 = vld [vmem:[#allocation3 + $0xa0] sm:$0xff]
  %v609 = vld [vmem:[#allocation3 + $0xa8] sm:$0xff]
  %v610 = vld [vmem:[#allocation3 + $0xb0] sm:$0xff]
  %v611 = vld [vmem:[#allocation3 + $0xb8] sm:$0xff]
  %v612 = vld [vmem:[#allocation3 + $0xc0] sm:$0xff]
  %v613 = vld [vmem:[#allocation3 + $0xc8] sm:$0xff]
  %v614 = vld [vmem:[#allocation3 + $0xd0] sm:$0xff]
  %v615 = vld [vmem:[#allocation3 + $0xd8] sm:$0xff]
  %v616 = vld [vmem:[#allocation3 + $0xe0] sm:$0xff]
  %v617 = vld [vmem:[#allocation3 + $0xe8] sm:$0xff]
  %v618 = vld [vmem:[#allocation3 + $0xf0] sm:$0xff]
  %v619 = vld [vmem:[#allocation3 + $0xf8] sm:$0xff]
  %v620 = vmul.f32 %v588, 0.125
  %v621 = vmul.f32 %v589, 0.125
  %v622 = vmul.f32 %v590, 0.125
  %v623 = vmul.f32 %v591, 0.125
  %v624 = vmul.f32 %v592, 0.125
  %v625 = vmul.f32 %v593, 0.125
  %v626 = vmul.f32 %v594, 0.125
  %v627 = vmul.f32 %v595, 0.125
  %v628 = vmul.f32 %v596, 0.125
  %v629 = vmul.f32 %v597, 0.125
  %v630 = vmul.f32 %v598, 0.125
  %v631 = vmul.f32 %v599, 0.125
  %v632 = vmul.f32 %v600, 0.125
  %v633 = vmul.f32 %v601, 0.125
  %v634 = vmul.f32 %v602, 0.125
  %v635 = vmul.f32 %v603, 0.125
  %v636 = vmul.f32 %v604, 0.125
  %v637 = vmul.f32 %v605, 0.125
  %v638 = vmul.f32 %v606, 0.125
  %v639 = vmul.f32 %v607, 0.125
  %v640 = vmul.f32 %v608, 0.125
  %v641 = vmul.f32 %v609, 0.125
  %v642 = vmul.f32 %v610, 0.125
  %v643 = vmul.f32 %v611, 0.125
  %v644 = vmul.f32 %v612, 0.125
  %v645 = vmul.f32 %v613, 0.125
  %v646 = vmul.f32 %v614, 0.125
  %v647 = vmul.f32 %v615, 0.125
  %v648 = vmul.f32 %v616, 0.125
  %v649 = vmul.f32 %v617, 0.125
  %v650 = vmul.f32 %v618, 0.125
  %v651 = vmul.f32 %v619, 0.125
  %s652 = scalar_lea.vmem [#allocation3], 16
  %v653 = vld [vmem:[%s652] sm:$0xff]
  %v654 = vld [vmem:[%s652 + $0x8] sm:$0xff]
  %v655 = vld [vmem:[%s652 + $0x10] sm:$0xff]
  %v656 = vld [vmem:[%s652 + $0x18] sm:$0xff]
  %v657 = vld [vmem:[%s652 + $0x20] sm:$0xff]
  %v658 = vld [vmem:[%s652 + $0x28] sm:$0xff]
  %v659 = vld [vmem:[%s652 + $0x30] sm:$0xff]
  %v660 = vld [vmem:[%s652 + $0x38] sm:$0xff]
  %v661 = vld [vmem:[%s652 + $0x40] sm:$0xff]
  %v662 = vld [vmem:[%s652 + $0x48] sm:$0xff]
  %v663 = vld [vmem:[%s652 + $0x50] sm:$0xff]
  %v664 = vld [vmem:[%s652 + $0x58] sm:$0xff]
  %v665 = vld [vmem:[%s652 + $0x60] sm:$0xff]
  %v666 = vld [vmem:[%s652 + $0x68] sm:$0xff]
  %v667 = vld [vmem:[%s652 + $0x70] sm:$0xff]
  %v668 = vld [vmem:[%s652 + $0x78] sm:$0xff]
  %v669 = vld [vmem:[%s652 + $0x80] sm:$0xff]
  %v670 = vld [vmem:[%s652 + $0x88] sm:$0xff]
  %v671 = vld [vmem:[%s652 + $0x90] sm:$0xff]
  %v672 = vld [vmem:[%s652 + $0x98] sm:$0xff]
  %v673 = vld [vmem:[%s652 + $0xa0] sm:$0xff]
  %v674 = vld [vmem:[%s652 + $0xa8] sm:$0xff]
  %v675 = vld [vmem:[%s652 + $0xb0] sm:$0xff]
  %v676 = vld [vmem:[%s652 + $0xb8] sm:$0xff]
  %v677 = vld [vmem:[%s652 + $0xc0] sm:$0xff]
  %v678 = vld [vmem:[%s652 + $0xc8] sm:$0xff]
  %v679 = vld [vmem:[%s652 + $0xd0] sm:$0xff]
  %v680 = vld [vmem:[%s652 + $0xd8] sm:$0xff]
  %v681 = vld [vmem:[%s652 + $0xe0] sm:$0xff]
  %v682 = vld [vmem:[%s652 + $0xe8] sm:$0xff]
  %v683 = vld [vmem:[%s652 + $0xf0] sm:$0xff]
  %v684 = vld [vmem:[%s652 + $0xf8] sm:$0xff]
  %v685 = vmul.f32 %v653, 0.375
  %v686 = vmul.f32 %v654, 0.375
  %v687 = vmul.f32 %v655, 0.375
  %v688 = vmul.f32 %v656, 0.375
  %v689 = vmul.f32 %v657, 0.375
  %v690 = vmul.f32 %v658, 0.375
  %v691 = vmul.f32 %v659, 0.375
  %v692 = vmul.f32 %v660, 0.375
  %v693 = vmul.f32 %v661, 0.375
  %v694 = vmul.f32 %v662, 0.375
  %v695 = vmul.f32 %v663, 0.375
  %v696 = vmul.f32 %v664, 0.375
  %v697 = vmul.f32 %v665, 0.375
  %v698 = vmul.f32 %v666, 0.375
  %v699 = vmul.f32 %v667, 0.375
  %v700 = vmul.f32 %v668, 0.375
  %v701 = vmul.f32 %v669, 0.375
  %v702 = vmul.f32 %v670, 0.375
  %v703 = vmul.f32 %v671, 0.375
  %v704 = vmul.f32 %v672, 0.375
  %v705 = vmul.f32 %v673, 0.375
  %v706 = vmul.f32 %v674, 0.375
  %v707 = vmul.f32 %v675, 0.375
  %v708 = vmul.f32 %v676, 0.375
  %v709 = vmul.f32 %v677, 0.375
  %v710 = vmul.f32 %v678, 0.375
  %v711 = vmul.f32 %v679, 0.375
  %v712 = vmul.f32 %v680, 0.375
  %v713 = vmul.f32 %v681, 0.375
  %v714 = vmul.f32 %v682, 0.375
  %v715 = vmul.f32 %v683, 0.375
  %v716 = vmul.f32 %v684, 0.375
  %v717 = vadd.f32 %v620, %v685
  %v718 = vadd.f32 %v621, %v686
  %v719 = vadd.f32 %v622, %v687
  %v720 = vadd.f32 %v623, %v688
  %v721 = vadd.f32 %v624, %v689
  %v722 = vadd.f32 %v625, %v690
  %v723 = vadd.f32 %v626, %v691
  %v724 = vadd.f32 %v627, %v692
  %v725 = vadd.f32 %v628, %v693
  %v726 = vadd.f32 %v629, %v694
  %v727 = vadd.f32 %v630, %v695
  %v728 = vadd.f32 %v631, %v696
  %v729 = vadd.f32 %v632, %v697
  %v730 = vadd.f32 %v633, %v698
  %v731 = vadd.f32 %v634, %v699
  %v732 = vadd.f32 %v635, %v700
  %v733 = vadd.f32 %v636, %v701
  %v734 = vadd.f32 %v637, %v702
  %v735 = vadd.f32 %v638, %v703
  %v736 = vadd.f32 %v639, %v704
  %v737 = vadd.f32 %v640, %v705
  %v738 = vadd.f32 %v641, %v706
  %v739 = vadd.f32 %v642, %v707
  %v740 = vadd.f32 %v643, %v708
  %v741 = vadd.f32 %v644, %v709
  %v742 = vadd.f32 %v645, %v710
  %v743 = vadd.f32 %v646, %v711
  %v744 = vadd.f32 %v647, %v712
  %v745 = vadd.f32 %v648, %v713
  %v746 = vadd.f32 %v649, %v714
  %v747 = vadd.f32 %v650, %v715
  %v748 = vadd.f32 %v651, %v716
  %s749 = scalar_lea.vmem [#allocation3], 32
  %v750 = vld [vmem:[%s749] sm:$0xff]
  %v751 = vld [vmem:[%s749 + $0x8] sm:$0xff]
  %v752 = vld [vmem:[%s749 + $0x10] sm:$0xff]
  %v753 = vld [vmem:[%s749 + $0x18] sm:$0xff]
  %v754 = vld [vmem:[%s749 + $0x20] sm:$0xff]
  %v755 = vld [vmem:[%s749 + $0x28] sm:$0xff]
  %v756 = vld [vmem:[%s749 + $0x30] sm:$0xff]
  %v757 = vld [vmem:[%s749 + $0x38] sm:$0xff]
  %v758 = vld [vmem:[%s749 + $0x40] sm:$0xff]
  %v759 = vld [vmem:[%s749 + $0x48] sm:$0xff]
  %v760 = vld [vmem:[%s749 + $0x50] sm:$0xff]
  %v761 = vld [vmem:[%s749 + $0x58] sm:$0xff]
  %v762 = vld [vmem:[%s749 + $0x60] sm:$0xff]
  %v763 = vld [vmem:[%s749 + $0x68] sm:$0xff]
  %v764 = vld [vmem:[%s749 + $0x70] sm:$0xff]
  %v765 = vld [vmem:[%s749 + $0x78] sm:$0xff]
  %v766 = vld [vmem:[%s749 + $0x80] sm:$0xff]
  %v767 = vld [vmem:[%s749 + $0x88] sm:$0xff]
  %v768 = vld [vmem:[%s749 + $0x90] sm:$0xff]
  %v769 = vld [vmem:[%s749 + $0x98] sm:$0xff]
  %v770 = vld [vmem:[%s749 + $0xa0] sm:$0xff]
  %v771 = vld [vmem:[%s749 + $0xa8] sm:$0xff]
  %v772 = vld [vmem:[%s749 + $0xb0] sm:$0xff]
  %v773 = vld [vmem:[%s749 + $0xb8] sm:$0xff]
  %v774 = vld [vmem:[%s749 + $0xc0] sm:$0xff]
  %v775 = vld [vmem:[%s749 + $0xc8] sm:$0xff]
  %v776 = vld [vmem:[%s749 + $0xd0] sm:$0xff]
  %v777 = vld [vmem:[%s749 + $0xd8] sm:$0xff]
  %v778 = vld [vmem:[%s749 + $0xe0] sm:$0xff]
  %v779 = vld [vmem:[%s749 + $0xe8] sm:$0xff]
  %v780 = vld [vmem:[%s749 + $0xf0] sm:$0xff]
  %v781 = vld [vmem:[%s749 + $0xf8] sm:$0xff]
  %v782 = vmul.f32 %v750, 0.375
  %v783 = vmul.f32 %v751, 0.375
  %v784 = vmul.f32 %v752, 0.375
  %v785 = vmul.f32 %v753, 0.375
  %v786 = vmul.f32 %v754, 0.375
  %v787 = vmul.f32 %v755, 0.375
  %v788 = vmul.f32 %v756, 0.375
  %v789 = vmul.f32 %v757, 0.375
  %v790 = vmul.f32 %v758, 0.375
  %v791 = vmul.f32 %v759, 0.375
  %v792 = vmul.f32 %v760, 0.375
  %v793 = vmul.f32 %v761, 0.375
  %v794 = vmul.f32 %v762, 0.375
  %v795 = vmul.f32 %v763, 0.375
  %v796 = vmul.f32 %v764, 0.375
  %v797 = vmul.f32 %v765, 0.375
  %v798 = vmul.f32 %v766, 0.375
  %v799 = vmul.f32 %v767, 0.375
  %v800 = vmul.f32 %v768, 0.375
  %v801 = vmul.f32 %v769, 0.375
  %v802 = vmul.f32 %v770, 0.375
  %v803 = vmul.f32 %v771, 0.375
  %v804 = vmul.f32 %v772, 0.375
  %v805 = vmul.f32 %v773, 0.375
  %v806 = vmul.f32 %v774, 0.375
  %v807 = vmul.f32 %v775, 0.375
  %v808 = vmul.f32 %v776, 0.375
  %v809 = vmul.f32 %v777, 0.375
  %v810 = vmul.f32 %v778, 0.375
  %v811 = vmul.f32 %v779, 0.375
  %v812 = vmul.f32 %v780, 0.375
  %v813 = vmul.f32 %v781, 0.375
  %v814 = vadd.f32 %v717, %v782
  %v815 = vadd.f32 %v718, %v783
  %v816 = vadd.f32 %v719, %v784
  %v817 = vadd.f32 %v720, %v785
  %v818 = vadd.f32 %v721, %v786
  %v819 = vadd.f32 %v722, %v787
  %v820 = vadd.f32 %v723, %v788
  %v821 = vadd.f32 %v724, %v789
  %v822 = vadd.f32 %v725, %v790
  %v823 = vadd.f32 %v726, %v791
  %v824 = vadd.f32 %v727, %v792
  %v825 = vadd.f32 %v728, %v793
  %v826 = vadd.f32 %v729, %v794
  %v827 = vadd.f32 %v730, %v795
  %v828 = vadd.f32 %v731, %v796
  %v829 = vadd.f32 %v732, %v797
  %v830 = vadd.f32 %v733, %v798
  %v831 = vadd.f32 %v734, %v799
  %v832 = vadd.f32 %v735, %v800
  %v833 = vadd.f32 %v736, %v801
  %v834 = vadd.f32 %v737, %v802
  %v835 = vadd.f32 %v738, %v803
  %v836 = vadd.f32 %v739, %v804
  %v837 = vadd.f32 %v740, %v805
  %v838 = vadd.f32 %v741, %v806
  %v839 = vadd.f32 %v742, %v807
  %v840 = vadd.f32 %v743, %v808
  %v841 = vadd.f32 %v744, %v809
  %v842 = vadd.f32 %v745, %v810
  %v843 = vadd.f32 %v746, %v811
  %v844 = vadd.f32 %v747, %v812
  %v845 = vadd.f32 %v748, %v813
  %s846 = scalar_lea.vmem [#allocation3], 48
  %v847 = vld [vmem:[%s846] sm:$0xff]
  %v848 = vld [vmem:[%s846 + $0x8] sm:$0xff]
  %v849 = vld [vmem:[%s846 + $0x10] sm:$0xff]
  %v850 = vld [vmem:[%s846 + $0x18] sm:$0xff]
  %v851 = vld [vmem:[%s846 + $0x20] sm:$0xff]
  %v852 = vld [vmem:[%s846 + $0x28] sm:$0xff]
  %v853 = vld [vmem:[%s846 + $0x30] sm:$0xff]
  %v854 = vld [vmem:[%s846 + $0x38] sm:$0xff]
  %v855 = vld [vmem:[%s846 + $0x40] sm:$0xff]
  %v856 = vld [vmem:[%s846 + $0x48] sm:$0xff]
  %v857 = vld [vmem:[%s846 + $0x50] sm:$0xff]
  %v858 = vld [vmem:[%s846 + $0x58] sm:$0xff]
  %v859 = vld [vmem:[%s846 + $0x60] sm:$0xff]
  %v860 = vld [vmem:[%s846 + $0x68] sm:$0xff]
  %v861 = vld [vmem:[%s846 + $0x70] sm:$0xff]
  %v862 = vld [vmem:[%s846 + $0x78] sm:$0xff]
  %v863 = vld [vmem:[%s846 + $0x80] sm:$0xff]
  %v864 = vld [vmem:[%s846 + $0x88] sm:$0xff]
  %v865 = vld [vmem:[%s846 + $0x90] sm:$0xff]
  %v866 = vld [vmem:[%s846 + $0x98] sm:$0xff]
  %v867 = vld [vmem:[%s846 + $0xa0] sm:$0xff]
  %v868 = vld [vmem:[%s846 + $0xa8] sm:$0xff]
  %v869 = vld [vmem:[%s846 + $0xb0] sm:$0xff]
  %v870 = vld [vmem:[%s846 + $0xb8] sm:$0xff]
  %v871 = vld [vmem:[%s846 + $0xc0] sm:$0xff]
  %v872 = vld [vmem:[%s846 + $0xc8] sm:$0xff]
  %v873 = vld [vmem:[%s846 + $0xd0] sm:$0xff]
  %v874 = vld [vmem:[%s846 + $0xd8] sm:$0xff]
  %v875 = vld [vmem:[%s846 + $0xe0] sm:$0xff]
  %v876 = vld [vmem:[%s846 + $0xe8] sm:$0xff]
  %v877 = vld [vmem:[%s846 + $0xf0] sm:$0xff]
  %v878 = vld [vmem:[%s846 + $0xf8] sm:$0xff]
  %v879 = vmul.f32 %v847, 0.125
  %v880 = vmul.f32 %v848, 0.125
  %v881 = vmul.f32 %v849, 0.125
  %v882 = vmul.f32 %v850, 0.125
  %v883 = vmul.f32 %v851, 0.125
  %v884 = vmul.f32 %v852, 0.125
  %v885 = vmul.f32 %v853, 0.125
  %v886 = vmul.f32 %v854, 0.125
  %v887 = vmul.f32 %v855, 0.125
  %v888 = vmul.f32 %v856, 0.125
  %v889 = vmul.f32 %v857, 0.125
  %v890 = vmul.f32 %v858, 0.125
  %v891 = vmul.f32 %v859, 0.125
  %v892 = vmul.f32 %v860, 0.125
  %v893 = vmul.f32 %v861, 0.125
  %v894 = vmul.f32 %v862, 0.125
  %v895 = vmul.f32 %v863, 0.125
  %v896 = vmul.f32 %v864, 0.125
  %v897 = vmul.f32 %v865, 0.125
  %v898 = vmul.f32 %v866, 0.125
  %v899 = vmul.f32 %v867, 0.125
  %v900 = vmul.f32 %v868, 0.125
  %v901 = vmul.f32 %v869, 0.125
  %v902 = vmul.f32 %v870, 0.125
  %v903 = vmul.f32 %v871, 0.125
  %v904 = vmul.f32 %v872, 0.125
  %v905 = vmul.f32 %v873, 0.125
  %v906 = vmul.f32 %v874, 0.125
  %v907 = vmul.f32 %v875, 0.125
  %v908 = vmul.f32 %v876, 0.125
  %v909 = vmul.f32 %v877, 0.125
  %v910 = vmul.f32 %v878, 0.125
  %v911 = vadd.f32 %v814, %v879
  %v912 = vadd.f32 %v815, %v880
  %v913 = vadd.f32 %v816, %v881
  %v914 = vadd.f32 %v817, %v882
  %v915 = vadd.f32 %v818, %v883
  %v916 = vadd.f32 %v819, %v884
  %v917 = vadd.f32 %v820, %v885
  %v918 = vadd.f32 %v821, %v886
  %v919 = vadd.f32 %v822, %v887
  %v920 = vadd.f32 %v823, %v888
  %v921 = vadd.f32 %v824, %v889
  %v922 = vadd.f32 %v825, %v890
  %v923 = vadd.f32 %v826, %v891
  %v924 = vadd.f32 %v827, %v892
  %v925 = vadd.f32 %v828, %v893
  %v926 = vadd.f32 %v829, %v894
  %v927 = vadd.f32 %v830, %v895
  %v928 = vadd.f32 %v831, %v896
  %v929 = vadd.f32 %v832, %v897
  %v930 = vadd.f32 %v833, %v898
  %v931 = vadd.f32 %v834, %v899
  %v932 = vadd.f32 %v835, %v900
  %v933 = vadd.f32 %v836, %v901
  %v934 = vadd.f32 %v837, %v902
  %v935 = vadd.f32 %v838, %v903
  %v936 = vadd.f32 %v839, %v904
  %v937 = vadd.f32 %v840, %v905
  %v938 = vadd.f32 %v841, %v906
  %v939 = vadd.f32 %v842, %v907
  %v940 = vadd.f32 %v843, %v908
  %v941 = vadd.f32 %v844, %v909
  %v942 = vadd.f32 %v845, %v910
  %943 = vst.msk [vmem:[%s1] sm:$0xff] %vm8, %v911
  %944 = vst.msk [vmem:[%s1 + $0x8] sm:$0xff] %vm8, %v912
  %945 = vst.msk [vmem:[%s1 + $0x10] sm:$0xff] %vm8, %v913
  %946 = vst.msk [vmem:[%s1 + $0x18] sm:$0xff] %vm8, %v914
  %947 = vst.msk [vmem:[%s1 + $0x20] sm:$0xff] %vm8, %v915
  %948 = vst.msk [vmem:[%s1 + $0x28] sm:$0xff] %vm8, %v916
  %949 = vst.msk [vmem:[%s1 + $0x30] sm:$0xff] %vm8, %v917
  %950 = vst.msk [vmem:[%s1 + $0x38] sm:$0xff] %vm8, %v918
  %951 = vst.msk [vmem:[%s1 + $0x40] sm:$0xff] %vm8, %v919
  %952 = vst.msk [vmem:[%s1 + $0x48] sm:$0xff] %vm8, %v920
  %953 = vst.msk [vmem:[%s1 + $0x50] sm:$0xff] %vm8, %v921
  %954 = vst.msk [vmem:[%s1 + $0x58] sm:$0xff] %vm8, %v922
  %955 = vst.msk [vmem:[%s1 + $0x60] sm:$0xff] %vm8, %v923
  %956 = vst.msk [vmem:[%s1 + $0x68] sm:$0xff] %vm8, %v924
  %957 = vst.msk [vmem:[%s1 + $0x70] sm:$0xff] %vm8, %v925
  %958 = vst.msk [vmem:[%s1 + $0x78] sm:$0xff] %vm8, %v926
  %959 = vst.msk [vmem:[%s1 + $0x80] sm:$0xff] %vm8, %v927
  %960 = vst.msk [vmem:[%s1 + $0x88] sm:$0xff] %vm8, %v928
  %961 = vst.msk [vmem:[%s1 + $0x90] sm:$0xff] %vm8, %v929
  %962 = vst.msk [vmem:[%s1 + $0x98] sm:$0xff] %vm8, %v930
  %963 = vst.msk [vmem:[%s1 + $0xa0] sm:$0xff] %vm8, %v931
  %964 = vst.msk [vmem:[%s1 + $0xa8] sm:$0xff] %vm8, %v932
  %965 = vst.msk [vmem:[%s1 + $0xb0] sm:$0xff] %vm8, %v933
  %966 = vst.msk [vmem:[%s1 + $0xb8] sm:$0xff] %vm8, %v934
  %967 = vst.msk [vmem:[%s1 + $0xc0] sm:$0xff] %vm8, %v935
  %968 = vst.msk [vmem:[%s1 + $0xc8] sm:$0xff] %vm8, %v936
  %969 = vst.msk [vmem:[%s1 + $0xd0] sm:$0xff] %vm8, %v937
  %970 = vst.msk [vmem:[%s1 + $0xd8] sm:$0xff] %vm8, %v938
  %971 = vst.msk [vmem:[%s1 + $0xe0] sm:$0xff] %vm8, %v939
  %972 = vst.msk [vmem:[%s1 + $0xe8] sm:$0xff] %vm8, %v940
  %973 = vst.msk [vmem:[%s1 + $0xf0] sm:$0xff] %vm8, %v941
  %974 = vst.msk [vmem:[%s1 + $0xf8] sm:$0xff] %vm8, %v942
  // Predicated region
  $region6: #{tpu_custom_call.1} parent=0 // pred_check
    _
  $region7: #{tpu_custom_call.1} parent=0 // pred_check_branch
    %976 = sbr.rel (0) target = $region9
  $region8: #{tpu_custom_call.1} parent=0 // pred_region
    _
  $region9: #{tpu_custom_call.1} parent=0 // pred_fallthru
    _
  // Predicated region
  $region10: #{tpu_custom_call.1} parent=0 // pred_check
    _
  $region11: #{tpu_custom_call.1} parent=0 // pred_check_branch
    %978 = sbr.rel (0) target = $region13
  $region12: #{tpu_custom_call.1} parent=0 // pred_region
    _
  $region13: #{tpu_custom_call.1} parent=0 // pred_fallthru
    _

</llo_original>
